<compile_context>
chip_gen: v5e
topology: v5e:2x2
jax: 0.10.0
libtpu: 0.0.40
codegen_flags: <defaults>
</compile_context>

<pallas_src>
import jax
import jax.numpy as jnp
from jax.experimental import pallas as pl
from jax.experimental.pallas import tpu as pltpu

# ----------------------------- configuration -----------------------------
BATCH = 8          # >= 8 fills all f32 sublanes (perf review); still small
SEQ_LEN = 8        # configs.seq_len  (T)
C_IN = 4           # configs.c_in     (N)
D_MODEL = 32       # configs.d_model  (hidden_units)
LATENT = 16        # configs.latent_size
INPUT_SIZE = SEQ_LEN * C_IN          # 32, must be even
HALF = INPUT_SIZE // 2               # 16
NOISE_SIZE = INPUT_SIZE - LATENT     # 16
N_COUPLING = 3                       # masks has 6 rows -> 6 // 2 layers
LEAKY_SLOPE = 0.01                   # nn.LeakyReLU default
H2 = 2 * D_MODEL                     # 64 = fused (s||t) hidden width = slab lane width
BIAS_ROWS = 8                        # biases replicated across 8 padding sublanes

assert INPUT_SIZE % 2 == 0
assert LATENT == HALF                # lets the flow state live as two (B, D/2) halves
assert NOISE_SIZE == HALF
assert BATCH <= BIAS_ROWS            # bias tiles are replicated to 8 rows

# ----------------------- packed-parameter slab layout ----------------------
# One block per coupling layer + one for the dynamics MLP.  All offsets are
# multiples of 8 so every weight/bias load is a sublane-aligned static slice.
OFF_A1, N_A1 = 0, HALF        # (HALF, 64): [sW1[keep_rows] | tW1[keep_rows]]
OFF_B1 = 16                   # (8, 64):   [sB1 | tB1] replicated over 8 rows
OFF_A2, N_A2 = 24, H2         # (64, 64):  blockdiag(sW2, tW2)
OFF_B2 = 88                   # (8, 64)
OFF_A3, N_A3 = 96, H2         # (64, 64):  blockdiag(sW3[:,upd], tW3[:,upd]) padded
OFF_B3 = 160                  # (8, 64)
BLOCK_ROWS = 168
N_BLOCKS = N_COUPLING + 1
SLAB_ROWS = N_BLOCKS * BLOCK_ROWS    # 672


# ------------------------------- kernel ----------------------------------
def nis_kernel(x_ref, noise_ref, params_ref, out_ref):
    B = x_ref.shape[0]

    def leaky(x):
        return jnp.maximum(x, LEAKY_SLOPE * x)

    def block_mlp(h, base):
        """3-layer MLP on the fused (s||t) weights stored at slab rows [base, base+168)."""
        A1 = params_ref[base + OFF_A1: base + OFF_A1 + N_A1, :]
        b1 = params_ref[base + OFF_B1: base + OFF_B1 + B, :]   # replicated bias tile
        A2 = params_ref[base + OFF_A2: base + OFF_A2 + N_A2, :]
        b2 = params_ref[base + OFF_B2: base + OFF_B2 + B, :]
        A3 = params_ref[base + OFF_A3: base + OFF_A3 + N_A3, :]
        b3 = params_ref[base + OFF_B3: base + OFF_B3 + B, :]
        h = leaky(jnp.dot(h, A1, preferred_element_type=jnp.float32) + b1)
        h = leaky(jnp.dot(h, A2, preferred_element_type=jnp.float32) + b2)
        return jnp.dot(h, A3, preferred_element_type=jnp.float32) + b3   # (B, 64)

    x = x_ref[...]
    lo = x[:, 0:HALF]                        # x[:, :D/2]
    hi = x[:, HALF:INPUT_SIZE]               # x[:, D/2:]
    noise = noise_ref[...]                   # (B, D - latent)

    # mask parity: even layers use mask1 (keep = hi half, update = lo half),
    # odd layers use mask2 (keep = lo half, update = hi half).
    def split(lo, hi, i):
        return (hi, lo) if i % 2 == 0 else (lo, hi)

    def merge(keep, upd, i):
        return (upd, keep) if i % 2 == 0 else (keep, upd)

    # ---------------- encoding: flow.f (coupling layers reversed) ----------
    for i in (2, 1, 0):
        keep, upd = split(lo, hi, i)
        st = block_mlp(keep, i * BLOCK_ROWS)        # cols 0:16 = s (pre-tanh), 16:32 = t
        s = jnp.tanh(st[:, 0:HALF])
        t = st[:, HALF:2 * HALF]
        upd = (upd - t) * jnp.exp(-s)
        lo, hi = merge(keep, upd, i)

    h_t = lo                                         # z[:, :latent_size]

    # ---------------- dynamics + residual + tanh ---------------------------
    dyn = block_mlp(h_t, N_COUPLING * BLOCK_ROWS)[:, 0:LATENT]
    h_t1 = jnp.tanh(dyn + h_t)                       # is_normalized = True

    # ---------------- decoding: [h_t1 | noise] through flow.g --------------
    lo, hi = h_t1, noise
    for i in (0, 1, 2):
        keep, upd = split(lo, hi, i)
        st = block_mlp(keep, i * BLOCK_ROWS)
        s = jnp.tanh(st[:, 0:HALF])
        t = st[:, HALF:2 * HALF]
        upd = upd * jnp.exp(s) + t
        lo, hi = merge(keep, upd, i)

    # single merged (B, 32) store instead of two masked 16-lane stores
    out_ref[...] = jnp.concatenate([lo, hi], axis=1)


# ------------------------------- wrapper ----------------------------------
@jax.jit
def nis_forward(x_t, param_slab, noise):
    """x_t: (B, T, N) f32, param_slab: (672, 64) f32, noise: (B, D-latent) f32."""
    B, T, N = x_t.shape
    D = T * N
    x = x_t.reshape(B, D).astype(jnp.float32)        # contiguous flatten (metadata-only)

    vmem = pl.BlockSpec(memory_space=pltpu.MemorySpace.VMEM)
    out = pl.pallas_call(
        nis_kernel,
        out_shape=jax.ShapeDtypeStruct((B, D), jnp.float32),
        in_specs=[vmem, vmem, vmem],
        out_specs=vmem,
    )(x, noise.astype(jnp.float32), param_slab)
    return out.reshape(B, T, N)


# ------------------- parameter fusion / packing (init-time) ----------------
def pack_params(p):
    D, H = INPUT_SIZE, D_MODEL
    slab = jnp.zeros((SLAB_ROWS, H2), jnp.float32)

    def put(s, base, off, arr):
        r, c = arr.shape
        return s.at[base + off: base + off + r, :c].set(arr.astype(jnp.float32))

    def put_bias(s, base, off, b):
        # replicate (1, w) bias across the 8 padding sublanes -> plain vreg add in-kernel
        w = b.shape[1]
        rep = jnp.tile(b.astype(jnp.float32), (BIAS_ROWS, 1))
        return s.at[base + off: base + off + BIAS_ROWS, :w].set(rep)

    for i in range(N_COUPLING):
        if i % 2 == 0:   # mask1 = [0]*HALF + [1]*HALF : keep = hi, update = lo
            keep = slice(HALF, D)
            upd = slice(0, HALF)
        else:            # mask2 : keep = lo, update = hi
            keep = slice(0, HALF)
            upd = slice(HALF, D)
        sW1, sW2, sW3 = p["sW1"][i], p["sW2"][i], p["sW3"][i]
        tW1, tW2, tW3 = p["tW1"][i], p["tW2"][i], p["tW3"][i]
        sB1, sB2, sB3 = p["sB1"][i], p["sB2"][i], p["sB3"][i]
        tB1, tB2, tB3 = p["tB1"][i], p["tB2"][i], p["tB3"][i]

        A1 = jnp.concatenate([sW1[keep, :], tW1[keep, :]], axis=1)          # (HALF, 64)
        b1 = jnp.concatenate([sB1, tB1], axis=1)                            # (1, 64)
        A2 = (jnp.zeros((H2, H2), jnp.float32)
              .at[:H, :H].set(sW2).at[H:, H:].set(tW2))                     # (64, 64)
        b2 = jnp.concatenate([sB2, tB2], axis=1)                            # (1, 64)
        A3 = (jnp.zeros((H2, 2 * HALF), jnp.float32)
              .at[:H, :HALF].set(sW3[:, upd]).at[H:, HALF:].set(tW3[:, upd]))  # (64, 32)
        b3 = jnp.concatenate([sB3[:, upd], tB3[:, upd]], axis=1)            # (1, 32)

        base = i * BLOCK_ROWS
        slab = put(slab, base, OFF_A1, A1)
        slab = put_bias(slab, base, OFF_B1, b1)
        slab = put(slab, base, OFF_A2, A2)
        slab = put_bias(slab, base, OFF_B2, b2)
        slab = put(slab, base, OFF_A3, A3)
        slab = put_bias(slab, base, OFF_B3, b3)

    # dynamics MLP occupies the last block (same layout, zero-padded to width 64)
    base = N_COUPLING * BLOCK_ROWS
    slab = put(slab, base, OFF_A1, p["dW1"])        # (16, 32)
    slab = put_bias(slab, base, OFF_B1, p["dB1"])   # (1, 32)
    slab = put(slab, base, OFF_A2, p["dW2"])        # (32, 32)
    slab = put_bias(slab, base, OFF_B2, p["dB2"])   # (1, 32)
    slab = put(slab, base, OFF_A3, p["dW3"])        # (32, 16)
    slab = put_bias(slab, base, OFF_B3, p["dB3"])   # (1, 16)
    return slab


# ------------------------- deterministic raw params ------------------------
def init_params(key):
    D, H, L = INPUT_SIZE, D_MODEL, LATENT
    ks = iter(jax.random.split(key, 64))

    def lin(k, fan_in, fan_out):
        bound = 1.0 / jnp.sqrt(fan_in)
        kw, kb = jax.random.split(k)
        W = jax.random.uniform(kw, (fan_in, fan_out), jnp.float32, -bound, bound)
        b = jax.random.uniform(kb, (1, fan_out), jnp.float32, -bound, bound)
        return W, b

    def stack_nets(shapes):
        Ws, Bs = [], []
        for _ in range(N_COUPLING):
            W, b = lin(next(ks), *shapes)
            Ws.append(W)
            Bs.append(b)
        return jnp.stack(Ws), jnp.stack(Bs)

    p = {}
    p["sW1"], p["sB1"] = stack_nets((D, H))
    p["sW2"], p["sB2"] = stack_nets((H, H))
    p["sW3"], p["sB3"] = stack_nets((H, D))
    p["tW1"], p["tB1"] = stack_nets((D, H))
    p["tW2"], p["tB2"] = stack_nets((H, H))
    p["tW3"], p["tB3"] = stack_nets((H, D))
    p["dW1"], p["dB1"] = lin(next(ks), L, H)
    p["dW2"], p["dB2"] = lin(next(ks), H, H)
    p["dW3"], p["dB3"] = lin(next(ks), H, L)

    mask1 = jnp.concatenate(
        [jnp.zeros((1, D // 2), jnp.float32), jnp.ones((1, D // 2), jnp.float32)], axis=1)
    mask2 = 1.0 - mask1
    p["masks"] = jnp.stack([mask1, mask2, mask1], axis=0)   # rows used by flow: [m1,m2,m1]
    return p


# --------------------------- pure-JAX reference -----------------------------
def nis_forward_ref(x_t, params, noise):
    B, T, N = x_t.shape
    D = T * N
    x = x_t.reshape(B, D).astype(jnp.float32)
    masks = params["masks"]
    hp = jax.lax.Precision.HIGHEST

    def mlp(h, W1, b1, W2, b2, W3, b3):
        h = jnp.dot(h, W1, precision=hp) + b1
        h = jnp.where(h > 0, h, LEAKY_SLOPE * h)
        h = jnp.dot(h, W2, precision=hp) + b2
        h = jnp.where(h > 0, h, LEAKY_SLOPE * h)
        return jnp.dot(h, W3, precision=hp) + b3

    def s_net(h, i):
        return jnp.tanh(mlp(h, params["sW1"][i], params["sB1"][i],
                            params["sW2"][i], params["sB2"][i],
                            params["sW3"][i], params["sB3"][i]))

    def t_net(h, i):
        return mlp(h, params["tW1"][i], params["tB1"][i],
                   params["tW2"][i], params["tB2"][i],
                   params["tW3"][i], params["tB3"][i])

    z = x
    for i in reversed(range(N_COUPLING)):
        m = masks[i]
        z_ = m * z
        s = s_net(z_, i) * (1 - m)
        t = t_net(z_, i) * (1 - m)
        z = (1 - m) * (z - t) * jnp.exp(-s) + z_
    h_t = z[:, :LATENT]
    d = mlp(h_t, params["dW1"], params["dB1"], params["dW2"], params["dB2"],
            params["dW3"], params["dB3"])
    h_t1 = jnp.tanh(d + h_t)
    xg = jnp.concatenate([h_t1, noise], axis=1)
    for i in range(N_COUPLING):
        m = masks[i]
        x_ = xg * m
        s = s_net(x_, i) * (1 - m)
        t = t_net(x_, i) * (1 - m)
        xg = x_ + (1 - m) * (xg * jnp.exp(s) + t)
    return xg.reshape(B, T, N)


# --------------------------------- main -------------------------------------
if __name__ == "__main__":
    key = jax.random.PRNGKey(0)
    k_x, k_p, k_n = jax.random.split(key, 3)

    x_t = jax.random.normal(k_x, (BATCH, SEQ_LEN, C_IN), jnp.float32)
    params = init_params(k_p)
    param_slab = pack_params(params)
    # decoding() samples N(0, I) noise of width (input_size - latent_size);
    # sampled here deterministically so the run is reproducible.
    noise = jax.random.normal(k_n, (BATCH, NOISE_SIZE), jnp.float32)

    x_t1_hat = nis_forward(x_t, param_slab, noise)
    x_t1_hat = jax.block_until_ready(x_t1_hat)

    ref = nis_forward_ref(x_t, params, noise)
    assert x_t1_hat.shape == (BATCH, SEQ_LEN, C_IN)
    # Tolerance 1e-3: kernel dots run at the MXU's default precision while the
    # reference uses Precision.HIGHEST (observed error is well below this).
    assert jnp.allclose(x_t1_hat, ref, rtol=1e-3, atol=1e-3), "mismatch vs JAX reference"

    print("KERNEL_OK")
</pallas_src>

<mosaic_0001>
module attributes {stable_mosaic.version = 11 : i64} {
  func.func @nis_kernel(%arg0: memref<8x32xf32, #tpu.memory_space<vmem>>, %arg1: memref<8x16xf32, #tpu.memory_space<vmem>>, %arg2: memref<672x64xf32, #tpu.memory_space<vmem>>, %arg3: memref<8x32xf32, #tpu.memory_space<vmem>>) attributes {dimension_semantics = [], scalar_prefetch = 0 : i64, scratch_operands = 0 : i64, tpu.core_type = #tpu.core_type<tc>} {
    %c0 = arith.constant 0 : index
    %c0_0 = arith.constant 0 : index
    %0 = vector.load %arg0[%c0, %c0_0] : memref<8x32xf32, #tpu.memory_space<vmem>>, vector<8x32xf32>
    %1 = vector.extract_strided_slice %0 {offsets = [0, 0], sizes = [8, 16], strides = [1, 1]} : vector<8x32xf32> to vector<8x16xf32>
    %2 = vector.extract_strided_slice %0 {offsets = [0, 16], sizes = [8, 16], strides = [1, 1]} : vector<8x32xf32> to vector<8x16xf32>
    %c0_1 = arith.constant 0 : index
    %c0_2 = arith.constant 0 : index
    %3 = vector.load %arg1[%c0_1, %c0_2] : memref<8x16xf32, #tpu.memory_space<vmem>>, vector<8x16xf32>
    %c336 = arith.constant 336 : index
    %c0_3 = arith.constant 0 : index
    %4 = vector.load %arg2[%c336, %c0_3] : memref<672x64xf32, #tpu.memory_space<vmem>>, vector<16x64xf32>
    %c352 = arith.constant 352 : index
    %c0_4 = arith.constant 0 : index
    %5 = vector.load %arg2[%c352, %c0_4] : memref<672x64xf32, #tpu.memory_space<vmem>>, vector<8x64xf32>
    %c360 = arith.constant 360 : index
    %c0_5 = arith.constant 0 : index
    %6 = vector.load %arg2[%c360, %c0_5] : memref<672x64xf32, #tpu.memory_space<vmem>>, vector<64x64xf32>
    %c424 = arith.constant 424 : index
    %c0_6 = arith.constant 0 : index
    %7 = vector.load %arg2[%c424, %c0_6] : memref<672x64xf32, #tpu.memory_space<vmem>>, vector<8x64xf32>
    %c432 = arith.constant 432 : index
    %c0_7 = arith.constant 0 : index
    %8 = vector.load %arg2[%c432, %c0_7] : memref<672x64xf32, #tpu.memory_space<vmem>>, vector<64x64xf32>
    %c496 = arith.constant 496 : index
    %c0_8 = arith.constant 0 : index
    %9 = vector.load %arg2[%c496, %c0_8] : memref<672x64xf32, #tpu.memory_space<vmem>>, vector<8x64xf32>
    %cst = arith.constant dense<0.000000e+00> : vector<8x64xf32>
    %10 = tpu.matmul %2, %4, %cst {dimension_numbers = #tpu.dot_dimension_numbers<[1], [0], [0], [1], [0, 0, 1, 1], [], []>} : vector<8x16xf32>, vector<16x64xf32>, vector<8x64xf32> -> vector<8x64xf32>
    %11 = arith.addf %10, %5 : vector<8x64xf32>
    %cst_9 = arith.constant 0.00999999977 : f32
    %12 = vector.broadcast %cst_9 : f32 to vector<8x64xf32>
    %13 = arith.mulf %12, %11 : vector<8x64xf32>
    %14 = arith.maximumf %11, %13 : vector<8x64xf32>
    %cst_10 = arith.constant dense<0.000000e+00> : vector<8x64xf32>
    %15 = tpu.matmul %14, %6, %cst_10 {dimension_numbers = #tpu.dot_dimension_numbers<[1], [0], [0], [1], [0, 0, 1, 1], [], []>} : vector<8x64xf32>, vector<64x64xf32>, vector<8x64xf32> -> vector<8x64xf32>
    %16 = arith.addf %15, %7 : vector<8x64xf32>
    %cst_11 = arith.constant 0.00999999977 : f32
    %17 = vector.broadcast %cst_11 : f32 to vector<8x64xf32>
    %18 = arith.mulf %17, %16 : vector<8x64xf32>
    %19 = arith.maximumf %16, %18 : vector<8x64xf32>
    %cst_12 = arith.constant dense<0.000000e+00> : vector<8x64xf32>
    %20 = tpu.matmul %19, %8, %cst_12 {dimension_numbers = #tpu.dot_dimension_numbers<[1], [0], [0], [1], [0, 0, 1, 1], [], []>} : vector<8x64xf32>, vector<64x64xf32>, vector<8x64xf32> -> vector<8x64xf32>
    %21 = arith.addf %20, %9 : vector<8x64xf32>
    %22 = vector.extract_strided_slice %21 {offsets = [0, 0], sizes = [8, 16], strides = [1, 1]} : vector<8x64xf32> to vector<8x16xf32>
    %23 = math.tanh %22 : vector<8x16xf32>
    %24 = vector.extract_strided_slice %21 {offsets = [0, 16], sizes = [8, 16], strides = [1, 1]} : vector<8x64xf32> to vector<8x16xf32>
    %25 = arith.subf %1, %24 : vector<8x16xf32>
    %cst_13 = arith.constant 0.000000e+00 : f32
    %26 = vector.broadcast %cst_13 : f32 to vector<8x16xf32>
    %27 = arith.subf %26, %23 : vector<8x16xf32>
    %28 = math.exp %27 : vector<8x16xf32>
    %29 = arith.mulf %25, %28 : vector<8x16xf32>
    %c168 = arith.constant 168 : index
    %c0_14 = arith.constant 0 : index
    %30 = vector.load %arg2[%c168, %c0_14] : memref<672x64xf32, #tpu.memory_space<vmem>>, vector<16x64xf32>
    %c184 = arith.constant 184 : index
    %c0_15 = arith.constant 0 : index
    %31 = vector.load %arg2[%c184, %c0_15] : memref<672x64xf32, #tpu.memory_space<vmem>>, vector<8x64xf32>
    %c192 = arith.constant 192 : index
    %c0_16 = arith.constant 0 : index
    %32 = vector.load %arg2[%c192, %c0_16] : memref<672x64xf32, #tpu.memory_space<vmem>>, vector<64x64xf32>
    %c256 = arith.constant 256 : index
    %c0_17 = arith.constant 0 : index
    %33 = vector.load %arg2[%c256, %c0_17] : memref<672x64xf32, #tpu.memory_space<vmem>>, vector<8x64xf32>
    %c264 = arith.constant 264 : index
    %c0_18 = arith.constant 0 : index
    %34 = vector.load %arg2[%c264, %c0_18] : memref<672x64xf32, #tpu.memory_space<vmem>>, vector<64x64xf32>
    %c328 = arith.constant 328 : index
    %c0_19 = arith.constant 0 : index
    %35 = vector.load %arg2[%c328, %c0_19] : memref<672x64xf32, #tpu.memory_space<vmem>>, vector<8x64xf32>
    %cst_20 = arith.constant dense<0.000000e+00> : vector<8x64xf32>
    %36 = tpu.matmul %29, %30, %cst_20 {dimension_numbers = #tpu.dot_dimension_numbers<[1], [0], [0], [1], [0, 0, 1, 1], [], []>} : vector<8x16xf32>, vector<16x64xf32>, vector<8x64xf32> -> vector<8x64xf32>
    %37 = arith.addf %36, %31 : vector<8x64xf32>
    %cst_21 = arith.constant 0.00999999977 : f32
    %38 = vector.broadcast %cst_21 : f32 to vector<8x64xf32>
    %39 = arith.mulf %38, %37 : vector<8x64xf32>
    %40 = arith.maximumf %37, %39 : vector<8x64xf32>
    %cst_22 = arith.constant dense<0.000000e+00> : vector<8x64xf32>
    %41 = tpu.matmul %40, %32, %cst_22 {dimension_numbers = #tpu.dot_dimension_numbers<[1], [0], [0], [1], [0, 0, 1, 1], [], []>} : vector<8x64xf32>, vector<64x64xf32>, vector<8x64xf32> -> vector<8x64xf32>
    %42 = arith.addf %41, %33 : vector<8x64xf32>
    %cst_23 = arith.constant 0.00999999977 : f32
    %43 = vector.broadcast %cst_23 : f32 to vector<8x64xf32>
    %44 = arith.mulf %43, %42 : vector<8x64xf32>
    %45 = arith.maximumf %42, %44 : vector<8x64xf32>
    %cst_24 = arith.constant dense<0.000000e+00> : vector<8x64xf32>
    %46 = tpu.matmul %45, %34, %cst_24 {dimension_numbers = #tpu.dot_dimension_numbers<[1], [0], [0], [1], [0, 0, 1, 1], [], []>} : vector<8x64xf32>, vector<64x64xf32>, vector<8x64xf32> -> vector<8x64xf32>
    %47 = arith.addf %46, %35 : vector<8x64xf32>
    %48 = vector.extract_strided_slice %47 {offsets = [0, 0], sizes = [8, 16], strides = [1, 1]} : vector<8x64xf32> to vector<8x16xf32>
    %49 = math.tanh %48 : vector<8x16xf32>
    %50 = vector.extract_strided_slice %47 {offsets = [0, 16], sizes = [8, 16], strides = [1, 1]} : vector<8x64xf32> to vector<8x16xf32>
    %51 = arith.subf %2, %50 : vector<8x16xf32>
    %cst_25 = arith.constant 0.000000e+00 : f32
    %52 = vector.broadcast %cst_25 : f32 to vector<8x16xf32>
    %53 = arith.subf %52, %49 : vector<8x16xf32>
    %54 = math.exp %53 : vector<8x16xf32>
    %55 = arith.mulf %51, %54 : vector<8x16xf32>
    %c0_26 = arith.constant 0 : index
    %c0_27 = arith.constant 0 : index
    %56 = vector.load %arg2[%c0_26, %c0_27] : memref<672x64xf32, #tpu.memory_space<vmem>>, vector<16x64xf32>
    %c16 = arith.constant 16 : index
    %c0_28 = arith.constant 0 : index
    %57 = vector.load %arg2[%c16, %c0_28] : memref<672x64xf32, #tpu.memory_space<vmem>>, vector<8x64xf32>
    %c24 = arith.constant 24 : index
    %c0_29 = arith.constant 0 : index
    %58 = vector.load %arg2[%c24, %c0_29] : memref<672x64xf32, #tpu.memory_space<vmem>>, vector<64x64xf32>
    %c88 = arith.constant 88 : index
    %c0_30 = arith.constant 0 : index
    %59 = vector.load %arg2[%c88, %c0_30] : memref<672x64xf32, #tpu.memory_space<vmem>>, vector<8x64xf32>
    %c96 = arith.constant 96 : index
    %c0_31 = arith.constant 0 : index
    %60 = vector.load %arg2[%c96, %c0_31] : memref<672x64xf32, #tpu.memory_space<vmem>>, vector<64x64xf32>
    %c160 = arith.constant 160 : index
    %c0_32 = arith.constant 0 : index
    %61 = vector.load %arg2[%c160, %c0_32] : memref<672x64xf32, #tpu.memory_space<vmem>>, vector<8x64xf32>
    %cst_33 = arith.constant dense<0.000000e+00> : vector<8x64xf32>
    %62 = tpu.matmul %55, %56, %cst_33 {dimension_numbers = #tpu.dot_dimension_numbers<[1], [0], [0], [1], [0, 0, 1, 1], [], []>} : vector<8x16xf32>, vector<16x64xf32>, vector<8x64xf32> -> vector<8x64xf32>
    %63 = arith.addf %62, %57 : vector<8x64xf32>
    %cst_34 = arith.constant 0.00999999977 : f32
    %64 = vector.broadcast %cst_34 : f32 to vector<8x64xf32>
    %65 = arith.mulf %64, %63 : vector<8x64xf32>
    %66 = arith.maximumf %63, %65 : vector<8x64xf32>
    %cst_35 = arith.constant dense<0.000000e+00> : vector<8x64xf32>
    %67 = tpu.matmul %66, %58, %cst_35 {dimension_numbers = #tpu.dot_dimension_numbers<[1], [0], [0], [1], [0, 0, 1, 1], [], []>} : vector<8x64xf32>, vector<64x64xf32>, vector<8x64xf32> -> vector<8x64xf32>
    %68 = arith.addf %67, %59 : vector<8x64xf32>
    %cst_36 = arith.constant 0.00999999977 : f32
    %69 = vector.broadcast %cst_36 : f32 to vector<8x64xf32>
    %70 = arith.mulf %69, %68 : vector<8x64xf32>
    %71 = arith.maximumf %68, %70 : vector<8x64xf32>
    %cst_37 = arith.constant dense<0.000000e+00> : vector<8x64xf32>
    %72 = tpu.matmul %71, %60, %cst_37 {dimension_numbers = #tpu.dot_dimension_numbers<[1], [0], [0], [1], [0, 0, 1, 1], [], []>} : vector<8x64xf32>, vector<64x64xf32>, vector<8x64xf32> -> vector<8x64xf32>
    %73 = arith.addf %72, %61 : vector<8x64xf32>
    %74 = vector.extract_strided_slice %73 {offsets = [0, 0], sizes = [8, 16], strides = [1, 1]} : vector<8x64xf32> to vector<8x16xf32>
    %75 = math.tanh %74 : vector<8x16xf32>
    %76 = vector.extract_strided_slice %73 {offsets = [0, 16], sizes = [8, 16], strides = [1, 1]} : vector<8x64xf32> to vector<8x16xf32>
    %77 = arith.subf %29, %76 : vector<8x16xf32>
    %cst_38 = arith.constant 0.000000e+00 : f32
    %78 = vector.broadcast %cst_38 : f32 to vector<8x16xf32>
    %79 = arith.subf %78, %75 : vector<8x16xf32>
    %80 = math.exp %79 : vector<8x16xf32>
    %81 = arith.mulf %77, %80 : vector<8x16xf32>
    %c504 = arith.constant 504 : index
    %c0_39 = arith.constant 0 : index
    %82 = vector.load %arg2[%c504, %c0_39] : memref<672x64xf32, #tpu.memory_space<vmem>>, vector<16x64xf32>
    %c520 = arith.constant 520 : index
    %c0_40 = arith.constant 0 : index
    %83 = vector.load %arg2[%c520, %c0_40] : memref<672x64xf32, #tpu.memory_space<vmem>>, vector<8x64xf32>
    %c528 = arith.constant 528 : index
    %c0_41 = arith.constant 0 : index
    %84 = vector.load %arg2[%c528, %c0_41] : memref<672x64xf32, #tpu.memory_space<vmem>>, vector<64x64xf32>
    %c592 = arith.constant 592 : index
    %c0_42 = arith.constant 0 : index
    %85 = vector.load %arg2[%c592, %c0_42] : memref<672x64xf32, #tpu.memory_space<vmem>>, vector<8x64xf32>
    %c600 = arith.constant 600 : index
    %c0_43 = arith.constant 0 : index
    %86 = vector.load %arg2[%c600, %c0_43] : memref<672x64xf32, #tpu.memory_space<vmem>>, vector<64x64xf32>
    %c664 = arith.constant 664 : index
    %c0_44 = arith.constant 0 : index
    %87 = vector.load %arg2[%c664, %c0_44] : memref<672x64xf32, #tpu.memory_space<vmem>>, vector<8x64xf32>
    %cst_45 = arith.constant dense<0.000000e+00> : vector<8x64xf32>
    %88 = tpu.matmul %81, %82, %cst_45 {dimension_numbers = #tpu.dot_dimension_numbers<[1], [0], [0], [1], [0, 0, 1, 1], [], []>} : vector<8x16xf32>, vector<16x64xf32>, vector<8x64xf32> -> vector<8x64xf32>
    %89 = arith.addf %88, %83 : vector<8x64xf32>
    %cst_46 = arith.constant 0.00999999977 : f32
    %90 = vector.broadcast %cst_46 : f32 to vector<8x64xf32>
    %91 = arith.mulf %90, %89 : vector<8x64xf32>
    %92 = arith.maximumf %89, %91 : vector<8x64xf32>
    %cst_47 = arith.constant dense<0.000000e+00> : vector<8x64xf32>
    %93 = tpu.matmul %92, %84, %cst_47 {dimension_numbers = #tpu.dot_dimension_numbers<[1], [0], [0], [1], [0, 0, 1, 1], [], []>} : vector<8x64xf32>, vector<64x64xf32>, vector<8x64xf32> -> vector<8x64xf32>
    %94 = arith.addf %93, %85 : vector<8x64xf32>
    %cst_48 = arith.constant 0.00999999977 : f32
    %95 = vector.broadcast %cst_48 : f32 to vector<8x64xf32>
    %96 = arith.mulf %95, %94 : vector<8x64xf32>
    %97 = arith.maximumf %94, %96 : vector<8x64xf32>
    %cst_49 = arith.constant dense<0.000000e+00> : vector<8x64xf32>
    %98 = tpu.matmul %97, %86, %cst_49 {dimension_numbers = #tpu.dot_dimension_numbers<[1], [0], [0], [1], [0, 0, 1, 1], [], []>} : vector<8x64xf32>, vector<64x64xf32>, vector<8x64xf32> -> vector<8x64xf32>
    %99 = arith.addf %98, %87 : vector<8x64xf32>
    %100 = vector.extract_strided_slice %99 {offsets = [0, 0], sizes = [8, 16], strides = [1, 1]} : vector<8x64xf32> to vector<8x16xf32>
    %101 = arith.addf %100, %81 : vector<8x16xf32>
    %102 = math.tanh %101 : vector<8x16xf32>
    %c0_50 = arith.constant 0 : index
    %c0_51 = arith.constant 0 : index
    %103 = vector.load %arg2[%c0_50, %c0_51] : memref<672x64xf32, #tpu.memory_space<vmem>>, vector<16x64xf32>
    %c16_52 = arith.constant 16 : index
    %c0_53 = arith.constant 0 : index
    %104 = vector.load %arg2[%c16_52, %c0_53] : memref<672x64xf32, #tpu.memory_space<vmem>>, vector<8x64xf32>
    %c24_54 = arith.constant 24 : index
    %c0_55 = arith.constant 0 : index
    %105 = vector.load %arg2[%c24_54, %c0_55] : memref<672x64xf32, #tpu.memory_space<vmem>>, vector<64x64xf32>
    %c88_56 = arith.constant 88 : index
    %c0_57 = arith.constant 0 : index
    %106 = vector.load %arg2[%c88_56, %c0_57] : memref<672x64xf32, #tpu.memory_space<vmem>>, vector<8x64xf32>
    %c96_58 = arith.constant 96 : index
    %c0_59 = arith.constant 0 : index
    %107 = vector.load %arg2[%c96_58, %c0_59] : memref<672x64xf32, #tpu.memory_space<vmem>>, vector<64x64xf32>
    %c160_60 = arith.constant 160 : index
    %c0_61 = arith.constant 0 : index
    %108 = vector.load %arg2[%c160_60, %c0_61] : memref<672x64xf32, #tpu.memory_space<vmem>>, vector<8x64xf32>
    %cst_62 = arith.constant dense<0.000000e+00> : vector<8x64xf32>
    %109 = tpu.matmul %3, %103, %cst_62 {dimension_numbers = #tpu.dot_dimension_numbers<[1], [0], [0], [1], [0, 0, 1, 1], [], []>} : vector<8x16xf32>, vector<16x64xf32>, vector<8x64xf32> -> vector<8x64xf32>
    %110 = arith.addf %109, %104 : vector<8x64xf32>
    %cst_63 = arith.constant 0.00999999977 : f32
    %111 = vector.broadcast %cst_63 : f32 to vector<8x64xf32>
    %112 = arith.mulf %111, %110 : vector<8x64xf32>
    %113 = arith.maximumf %110, %112 : vector<8x64xf32>
    %cst_64 = arith.constant dense<0.000000e+00> : vector<8x64xf32>
    %114 = tpu.matmul %113, %105, %cst_64 {dimension_numbers = #tpu.dot_dimension_numbers<[1], [0], [0], [1], [0, 0, 1, 1], [], []>} : vector<8x64xf32>, vector<64x64xf32>, vector<8x64xf32> -> vector<8x64xf32>
    %115 = arith.addf %114, %106 : vector<8x64xf32>
    %cst_65 = arith.constant 0.00999999977 : f32
    %116 = vector.broadcast %cst_65 : f32 to vector<8x64xf32>
    %117 = arith.mulf %116, %115 : vector<8x64xf32>
    %118 = arith.maximumf %115, %117 : vector<8x64xf32>
    %cst_66 = arith.constant dense<0.000000e+00> : vector<8x64xf32>
    %119 = tpu.matmul %118, %107, %cst_66 {dimension_numbers = #tpu.dot_dimension_numbers<[1], [0], [0], [1], [0, 0, 1, 1], [], []>} : vector<8x64xf32>, vector<64x64xf32>, vector<8x64xf32> -> vector<8x64xf32>
    %120 = arith.addf %119, %108 : vector<8x64xf32>
    %121 = vector.extract_strided_slice %120 {offsets = [0, 0], sizes = [8, 16], strides = [1, 1]} : vector<8x64xf32> to vector<8x16xf32>
    %122 = math.tanh %121 : vector<8x16xf32>
    %123 = vector.extract_strided_slice %120 {offsets = [0, 16], sizes = [8, 16], strides = [1, 1]} : vector<8x64xf32> to vector<8x16xf32>
    %124 = math.exp %122 : vector<8x16xf32>
    %125 = arith.mulf %102, %124 : vector<8x16xf32>
    %126 = arith.addf %125, %123 : vector<8x16xf32>
    %c168_67 = arith.constant 168 : index
    %c0_68 = arith.constant 0 : index
    %127 = vector.load %arg2[%c168_67, %c0_68] : memref<672x64xf32, #tpu.memory_space<vmem>>, vector<16x64xf32>
    %c184_69 = arith.constant 184 : index
    %c0_70 = arith.constant 0 : index
    %128 = vector.load %arg2[%c184_69, %c0_70] : memref<672x64xf32, #tpu.memory_space<vmem>>, vector<8x64xf32>
    %c192_71 = arith.constant 192 : index
    %c0_72 = arith.constant 0 : index
    %129 = vector.load %arg2[%c192_71, %c0_72] : memref<672x64xf32, #tpu.memory_space<vmem>>, vector<64x64xf32>
    %c256_73 = arith.constant 256 : index
    %c0_74 = arith.constant 0 : index
    %130 = vector.load %arg2[%c256_73, %c0_74] : memref<672x64xf32, #tpu.memory_space<vmem>>, vector<8x64xf32>
    %c264_75 = arith.constant 264 : index
    %c0_76 = arith.constant 0 : index
    %131 = vector.load %arg2[%c264_75, %c0_76] : memref<672x64xf32, #tpu.memory_space<vmem>>, vector<64x64xf32>
    %c328_77 = arith.constant 328 : index
    %c0_78 = arith.constant 0 : index
    %132 = vector.load %arg2[%c328_77, %c0_78] : memref<672x64xf32, #tpu.memory_space<vmem>>, vector<8x64xf32>
    %cst_79 = arith.constant dense<0.000000e+00> : vector<8x64xf32>
    %133 = tpu.matmul %126, %127, %cst_79 {dimension_numbers = #tpu.dot_dimension_numbers<[1], [0], [0], [1], [0, 0, 1, 1], [], []>} : vector<8x16xf32>, vector<16x64xf32>, vector<8x64xf32> -> vector<8x64xf32>
    %134 = arith.addf %133, %128 : vector<8x64xf32>
    %cst_80 = arith.constant 0.00999999977 : f32
    %135 = vector.broadcast %cst_80 : f32 to vector<8x64xf32>
    %136 = arith.mulf %135, %134 : vector<8x64xf32>
    %137 = arith.maximumf %134, %136 : vector<8x64xf32>
    %cst_81 = arith.constant dense<0.000000e+00> : vector<8x64xf32>
    %138 = tpu.matmul %137, %129, %cst_81 {dimension_numbers = #tpu.dot_dimension_numbers<[1], [0], [0], [1], [0, 0, 1, 1], [], []>} : vector<8x64xf32>, vector<64x64xf32>, vector<8x64xf32> -> vector<8x64xf32>
    %139 = arith.addf %138, %130 : vector<8x64xf32>
    %cst_82 = arith.constant 0.00999999977 : f32
    %140 = vector.broadcast %cst_82 : f32 to vector<8x64xf32>
    %141 = arith.mulf %140, %139 : vector<8x64xf32>
    %142 = arith.maximumf %139, %141 : vector<8x64xf32>
    %cst_83 = arith.constant dense<0.000000e+00> : vector<8x64xf32>
    %143 = tpu.matmul %142, %131, %cst_83 {dimension_numbers = #tpu.dot_dimension_numbers<[1], [0], [0], [1], [0, 0, 1, 1], [], []>} : vector<8x64xf32>, vector<64x64xf32>, vector<8x64xf32> -> vector<8x64xf32>
    %144 = arith.addf %143, %132 : vector<8x64xf32>
    %145 = vector.extract_strided_slice %144 {offsets = [0, 0], sizes = [8, 16], strides = [1, 1]} : vector<8x64xf32> to vector<8x16xf32>
    %146 = math.tanh %145 : vector<8x16xf32>
    %147 = vector.extract_strided_slice %144 {offsets = [0, 16], sizes = [8, 16], strides = [1, 1]} : vector<8x64xf32> to vector<8x16xf32>
    %148 = math.exp %146 : vector<8x16xf32>
    %149 = arith.mulf %3, %148 : vector<8x16xf32>
    %150 = arith.addf %149, %147 : vector<8x16xf32>
    %c336_84 = arith.constant 336 : index
    %c0_85 = arith.constant 0 : index
    %151 = vector.load %arg2[%c336_84, %c0_85] : memref<672x64xf32, #tpu.memory_space<vmem>>, vector<16x64xf32>
    %c352_86 = arith.constant 352 : index
    %c0_87 = arith.constant 0 : index
    %152 = vector.load %arg2[%c352_86, %c0_87] : memref<672x64xf32, #tpu.memory_space<vmem>>, vector<8x64xf32>
    %c360_88 = arith.constant 360 : index
    %c0_89 = arith.constant 0 : index
    %153 = vector.load %arg2[%c360_88, %c0_89] : memref<672x64xf32, #tpu.memory_space<vmem>>, vector<64x64xf32>
    %c424_90 = arith.constant 424 : index
    %c0_91 = arith.constant 0 : index
    %154 = vector.load %arg2[%c424_90, %c0_91] : memref<672x64xf32, #tpu.memory_space<vmem>>, vector<8x64xf32>
    %c432_92 = arith.constant 432 : index
    %c0_93 = arith.constant 0 : index
    %155 = vector.load %arg2[%c432_92, %c0_93] : memref<672x64xf32, #tpu.memory_space<vmem>>, vector<64x64xf32>
    %c496_94 = arith.constant 496 : index
    %c0_95 = arith.constant 0 : index
    %156 = vector.load %arg2[%c496_94, %c0_95] : memref<672x64xf32, #tpu.memory_space<vmem>>, vector<8x64xf32>
    %cst_96 = arith.constant dense<0.000000e+00> : vector<8x64xf32>
    %157 = tpu.matmul %150, %151, %cst_96 {dimension_numbers = #tpu.dot_dimension_numbers<[1], [0], [0], [1], [0, 0, 1, 1], [], []>} : vector<8x16xf32>, vector<16x64xf32>, vector<8x64xf32> -> vector<8x64xf32>
    %158 = arith.addf %157, %152 : vector<8x64xf32>
    %cst_97 = arith.constant 0.00999999977 : f32
    %159 = vector.broadcast %cst_97 : f32 to vector<8x64xf32>
    %160 = arith.mulf %159, %158 : vector<8x64xf32>
    %161 = arith.maximumf %158, %160 : vector<8x64xf32>
    %cst_98 = arith.constant dense<0.000000e+00> : vector<8x64xf32>
    %162 = tpu.matmul %161, %153, %cst_98 {dimension_numbers = #tpu.dot_dimension_numbers<[1], [0], [0], [1], [0, 0, 1, 1], [], []>} : vector<8x64xf32>, vector<64x64xf32>, vector<8x64xf32> -> vector<8x64xf32>
    %163 = arith.addf %162, %154 : vector<8x64xf32>
    %cst_99 = arith.constant 0.00999999977 : f32
    %164 = vector.broadcast %cst_99 : f32 to vector<8x64xf32>
    %165 = arith.mulf %164, %163 : vector<8x64xf32>
    %166 = arith.maximumf %163, %165 : vector<8x64xf32>
    %cst_100 = arith.constant dense<0.000000e+00> : vector<8x64xf32>
    %167 = tpu.matmul %166, %155, %cst_100 {dimension_numbers = #tpu.dot_dimension_numbers<[1], [0], [0], [1], [0, 0, 1, 1], [], []>} : vector<8x64xf32>, vector<64x64xf32>, vector<8x64xf32> -> vector<8x64xf32>
    %168 = arith.addf %167, %156 : vector<8x64xf32>
    %169 = vector.extract_strided_slice %168 {offsets = [0, 0], sizes = [8, 16], strides = [1, 1]} : vector<8x64xf32> to vector<8x16xf32>
    %170 = math.tanh %169 : vector<8x16xf32>
    %171 = vector.extract_strided_slice %168 {offsets = [0, 16], sizes = [8, 16], strides = [1, 1]} : vector<8x64xf32> to vector<8x16xf32>
    %172 = math.exp %170 : vector<8x16xf32>
    %173 = arith.mulf %126, %172 : vector<8x16xf32>
    %174 = arith.addf %173, %171 : vector<8x16xf32>
    %175 = tpu.concatenate %174, %150 in 1 : vector<8x16xf32>, vector<8x16xf32> -> vector<8x32xf32>
    %c0_101 = arith.constant 0 : index
    %c0_102 = arith.constant 0 : index
    %176 = vector.load %arg3[%c0_101, %c0_102] : memref<8x32xf32, #tpu.memory_space<vmem>>, vector<8x32xf32>
    tpu.vector_store %arg3[%c0_101, %c0_102], %175 {strides = array<i32>} : memref<8x32xf32, #tpu.memory_space<vmem>>, vector<8x32xf32>,
    return
  }
}

</mosaic_0001>

<llo_original>
// kernel: nis_forward.1
$region0: #{nis_forward.1}
  #allocation0 [shape = 'u32[]', space=smem, size = 0x4, offset = 0x4, fixed_abs, tag = 'smem constant byte address 0x4 - core index']
  #allocation1 [shape = 'u32[72,128]{1,0:T(1,128)}', space=vmem, size = 0x9000, scoped, tag = 'internal scratch']
  %s0 = inlined_call_operand.vmem [shape: f32[8,32], index: 0, kind: input, shape index: {}]
  %s1 = inlined_call_operand.vmem [shape: f32[8,16], index: 1, kind: input, shape index: {}]
  %s2 = inlined_call_operand.vmem [shape: f32[672,64], index: 2, kind: input, shape index: {}]
  %s3 = inlined_call_operand.vmem [shape: f32[8,32], index: 3, kind: output, shape index: {}]
  %s4 = sld [smem:[#allocation0]]
  $region22: #{nis_forward.1} parent=0
    _
  %s6 = ssub.s32 1, %s4
  %s7 = scalar_select 0, %s6, %s4
  // Predicated region
  $region2: #{nis_forward.1} parent=0 // pred_check
    _
  $region3: #{nis_forward.1} parent=0 // pred_check_branch
    %9 = sbr.rel (0) target = $region5
  $region4: #{nis_forward.1} parent=0 // pred_region
    _
  $region5: #{nis_forward.1} parent=0 // pred_fallthru
    _
  // Predicated region
  $region6: #{nis_forward.1} parent=0 // pred_check
    _
  $region7: #{nis_forward.1} parent=0 // pred_check_branch
    %11 = sbr.rel (0) target = $region9
  $region8: #{nis_forward.1} parent=0 // pred_region
    _
  $region9: #{nis_forward.1} parent=0 // pred_fallthru
    _
  // Predicated region
  $region10: #{nis_forward.1} parent=0 // pred_check
    _
  $region11: #{nis_forward.1} parent=0 // pred_check_branch
    %13 = sbr.rel (0) target = $region13
  $region12: #{nis_forward.1} parent=0 // pred_region
    _
  $region13: #{nis_forward.1} parent=0 // pred_fallthru
    _
  %v14 = vld [vmem:[%s0] sm:$0xff]
  %v15 = vld [vmem:[%s1] sm:$0xff]
  %v16 = vld [vmem:[%s2 + $0x150] sm:$0xff]
  %v17 = vld [vmem:[%s2 + $0x158] sm:$0xff]
  %v18 = vld [vmem:[%s2 + $0x160] sm:$0xff]
  %v19 = vld [vmem:[%s2 + $0x168] sm:$0xff]
  %v20 = vld [vmem:[%s2 + $0x170] sm:$0xff]
  %v21 = vld [vmem:[%s2 + $0x178] sm:$0xff]
  %v22 = vld [vmem:[%s2 + $0x180] sm:$0xff]
  %v23 = vld [vmem:[%s2 + $0x188] sm:$0xff]
  %v24 = vld [vmem:[%s2 + $0x190] sm:$0xff]
  %v25 = vld [vmem:[%s2 + $0x198] sm:$0xff]
  %v26 = vld [vmem:[%s2 + $0x1a0] sm:$0xff]
  %v27 = vld [vmem:[%s2 + $0x1a8] sm:$0xff]
  %v28 = vld [vmem:[%s2 + $0x1b0] sm:$0xff]
  %v29 = vld [vmem:[%s2 + $0x1b8] sm:$0xff]
  %v30 = vld [vmem:[%s2 + $0x1c0] sm:$0xff]
  %v31 = vld [vmem:[%s2 + $0x1c8] sm:$0xff]
  %v32 = vld [vmem:[%s2 + $0x1d0] sm:$0xff]
  %v33 = vld [vmem:[%s2 + $0x1d8] sm:$0xff]
  %v34 = vld [vmem:[%s2 + $0x1e0] sm:$0xff]
  %v35 = vld [vmem:[%s2 + $0x1e8] sm:$0xff]
  %v36 = vld [vmem:[%s2 + $0x1f0] sm:$0xff]
  %38 = vrot.lane.b32.xlu0 %v14, 112
  %v39 = vpop.permute.xlu0 %38
  %vm40 = vcmask 130048
  %v41 = vsel %vm40, %v39, 0
  %43 = vmatpush.msra.mxu0 0.0
  %44 = vmatpush.msra.mxu0 0.0
  %45 = vmatpush.msra.mxu0 0.0
  %46 = vmatpush.msra.mxu0 0.0
  %47 = vmatpush.msra.mxu0 0.0
  %48 = vmatpush.msra.mxu0 0.0
  %49 = vmatpush.msra.mxu0 0.0
  %50 = vmatpush.msra.mxu0 0.0
  %51 = vmatpush.msra.mxu0 0.0
  %52 = vmatpush.msra.mxu0 0.0
  %53 = vmatpush.msra.mxu0 0.0
  %54 = vmatpush.msra.mxu0 0.0
  %55 = vmatpush.msra.mxu0 0.0
  %56 = vmatpush.msra.mxu0 0.0
  %57 = vmatpush.msra.mxu0 %v17
  %58 = vmatpush.msra.mxu0 %v16
  %59 = vmatmul.f32.gmra.mxu0 %v41
  %v60 = vpop.f32.mrf.mxu0
  %v61 = vadd.f32 %v18, %v60
  %62 = vdwg.mxu0
  %v63 = vmul.f32 %v61, 0.01
  %v64 = vmax.f32 %v61, %v63
  %vm65 = vcmask 523264
  %v67 = vsel %vm65, %v64, 0
  %69 = vmatpush.msra.mxu0 0.0
  %70 = vmatpush.msra.mxu0 0.0
  %71 = vmatpush.msra.mxu0 0.0
  %72 = vmatpush.msra.mxu0 0.0
  %73 = vmatpush.msra.mxu0 0.0
  %74 = vmatpush.msra.mxu0 0.0
  %75 = vmatpush.msra.mxu0 0.0
  %76 = vmatpush.msra.mxu0 0.0
  %77 = vmatpush.msra.mxu0 %v26
  %78 = vmatpush.msra.mxu0 %v25
  %79 = vmatpush.msra.mxu0 %v24
  %80 = vmatpush.msra.mxu0 %v23
  %81 = vmatpush.msra.mxu0 %v22
  %82 = vmatpush.msra.mxu0 %v21
  %83 = vmatpush.msra.mxu0 %v20
  %84 = vmatpush.msra.mxu0 %v19
  %85 = vmatmul.f32.gmra.mxu0 %v67
  %v86 = vpop.f32.mrf.mxu0
  %v87 = vadd.f32 %v27, %v86
  %88 = vdwg.mxu0
  %v89 = vmul.f32 %v87, 0.01
  %v90 = vmax.f32 %v87, %v89
  %v92 = vsel %vm65, %v90, 0
  %94 = vmatpush.msra.mxu0 0.0
  %95 = vmatpush.msra.mxu0 0.0
  %96 = vmatpush.msra.mxu0 0.0
  %97 = vmatpush.msra.mxu0 0.0
  %98 = vmatpush.msra.mxu0 0.0
  %99 = vmatpush.msra.mxu0 0.0
  %100 = vmatpush.msra.mxu0 0.0
  %101 = vmatpush.msra.mxu0 0.0
  %102 = vmatpush.msra.mxu0 %v35
  %103 = vmatpush.msra.mxu0 %v34
  %104 = vmatpush.msra.mxu0 %v33
  %105 = vmatpush.msra.mxu0 %v32
  %106 = vmatpush.msra.mxu0 %v31
  %107 = vmatpush.msra.mxu0 %v30
  %108 = vmatpush.msra.mxu0 %v29
  %109 = vmatpush.msra.mxu0 %v28
  %110 = vmatmul.f32.gmra.mxu0 %v92
  %v111 = vpop.f32.mrf.mxu0
  %v112 = vadd.f32 %v36, %v111
  %113 = vdwg.mxu0
  %v114 = vtanh.pop %v112
  %116 = vrot.lane.b32.xlu0 %v112, 112
  %v117 = vpop.permute.xlu0 %116
  %v119 = vsub.f32 %v14, %v117
  %v120 = vsub.f32 0.0, %v114
  %v121 = vmul.f32 %v120, 1.442695
  %v122 = vpow.pop %v121
  %v123 = vmul.f32 %v119, %v122
  %v124 = vld [vmem:[%s2 + $0xa8] sm:$0xff]
  %v125 = vld [vmem:[%s2 + $0xb0] sm:$0xff]
  %v126 = vld [vmem:[%s2 + $0xb8] sm:$0xff]
  %v127 = vld [vmem:[%s2 + $0xc0] sm:$0xff]
  %v128 = vld [vmem:[%s2 + $0xc8] sm:$0xff]
  %v129 = vld [vmem:[%s2 + $0xd0] sm:$0xff]
  %v130 = vld [vmem:[%s2 + $0xd8] sm:$0xff]
  %v131 = vld [vmem:[%s2 + $0xe0] sm:$0xff]
  %v132 = vld [vmem:[%s2 + $0xe8] sm:$0xff]
  %v133 = vld [vmem:[%s2 + $0xf0] sm:$0xff]
  %v134 = vld [vmem:[%s2 + $0xf8] sm:$0xff]
  %v135 = vld [vmem:[%s2 + $0x100] sm:$0xff]
  %v136 = vld [vmem:[%s2 + $0x108] sm:$0xff]
  %v137 = vld [vmem:[%s2 + $0x110] sm:$0xff]
  %v138 = vld [vmem:[%s2 + $0x118] sm:$0xff]
  %v139 = vld [vmem:[%s2 + $0x120] sm:$0xff]
  %v140 = vld [vmem:[%s2 + $0x128] sm:$0xff]
  %v141 = vld [vmem:[%s2 + $0x130] sm:$0xff]
  %v142 = vld [vmem:[%s2 + $0x138] sm:$0xff]
  %v143 = vld [vmem:[%s2 + $0x140] sm:$0xff]
  %v144 = vld [vmem:[%s2 + $0x148] sm:$0xff]
  %v146 = vsel %vm40, %v123, 0
  %148 = vmatpush.msra.mxu0 0.0
  %149 = vmatpush.msra.mxu0 0.0
  %150 = vmatpush.msra.mxu0 0.0
  %151 = vmatpush.msra.mxu0 0.0
  %152 = vmatpush.msra.mxu0 0.0
  %153 = vmatpush.msra.mxu0 0.0
  %154 = vmatpush.msra.mxu0 0.0
  %155 = vmatpush.msra.mxu0 0.0
  %156 = vmatpush.msra.mxu0 0.0
  %157 = vmatpush.msra.mxu0 0.0
  %158 = vmatpush.msra.mxu0 0.0
  %159 = vmatpush.msra.mxu0 0.0
  %160 = vmatpush.msra.mxu0 0.0
  %161 = vmatpush.msra.mxu0 0.0
  %162 = vmatpush.msra.mxu0 %v125
  %163 = vmatpush.msra.mxu0 %v124
  %164 = vmatmul.f32.gmra.mxu0 %v146
  %v165 = vpop.f32.mrf.mxu0
  %v166 = vadd.f32 %v126, %v165
  %167 = vdwg.mxu0
  %v168 = vmul.f32 %v166, 0.01
  %v169 = vmax.f32 %v166, %v168
  %v171 = vsel %vm65, %v169, 0
  %173 = vmatpush.msra.mxu0 0.0
  %174 = vmatpush.msra.mxu0 0.0
  %175 = vmatpush.msra.mxu0 0.0
  %176 = vmatpush.msra.mxu0 0.0
  %177 = vmatpush.msra.mxu0 0.0
  %178 = vmatpush.msra.mxu0 0.0
  %179 = vmatpush.msra.mxu0 0.0
  %180 = vmatpush.msra.mxu0 0.0
  %181 = vmatpush.msra.mxu0 %v134
  %182 = vmatpush.msra.mxu0 %v133
  %183 = vmatpush.msra.mxu0 %v132
  %184 = vmatpush.msra.mxu0 %v131
  %185 = vmatpush.msra.mxu0 %v130
  %186 = vmatpush.msra.mxu0 %v129
  %187 = vmatpush.msra.mxu0 %v128
  %188 = vmatpush.msra.mxu0 %v127
  %189 = vmatmul.f32.gmra.mxu0 %v171
  %v190 = vpop.f32.mrf.mxu0
  %v191 = vadd.f32 %v135, %v190
  %192 = vdwg.mxu0
  %v193 = vmul.f32 %v191, 0.01
  %v194 = vmax.f32 %v191, %v193
  %v196 = vsel %vm65, %v194, 0
  %198 = vmatpush.msra.mxu0 0.0
  %199 = vmatpush.msra.mxu0 0.0
  %200 = vmatpush.msra.mxu0 0.0
  %201 = vmatpush.msra.mxu0 0.0
  %202 = vmatpush.msra.mxu0 0.0
  %203 = vmatpush.msra.mxu0 0.0
  %204 = vmatpush.msra.mxu0 0.0
  %205 = vmatpush.msra.mxu0 0.0
  %206 = vmatpush.msra.mxu0 %v143
  %207 = vmatpush.msra.mxu0 %v142
  %208 = vmatpush.msra.mxu0 %v141
  %209 = vmatpush.msra.mxu0 %v140
  %210 = vmatpush.msra.mxu0 %v139
  %211 = vmatpush.msra.mxu0 %v138
  %212 = vmatpush.msra.mxu0 %v137
  %213 = vmatpush.msra.mxu0 %v136
  %214 = vmatmul.f32.gmra.mxu0 %v196
  %v215 = vpop.f32.mrf.mxu0
  %v216 = vadd.f32 %v144, %v215
  %217 = vdwg.mxu0
  %v218 = vtanh.pop %v216
  %v219 = vsub.f32 %v14, %v216
  %v220 = vsub.f32 0.0, %v218
  %v221 = vmul.f32 %v220, 1.442695
  %v222 = vpow.pop %v221
  %224 = vrot.lane.b32.xlu0 %v222, 16
  %v225 = vpop.permute.xlu0 %224
  %v227 = vmul.f32 %v219, %v225
  %v228 = vld [vmem:[%s2] sm:$0xff]
  %v229 = vld [vmem:[%s2 + $0x8] sm:$0xff]
  %v230 = vld [vmem:[%s2 + $0x10] sm:$0xff]
  %v231 = vld [vmem:[%s2 + $0x18] sm:$0xff]
  %v232 = vld [vmem:[%s2 + $0x20] sm:$0xff]
  %v233 = vld [vmem:[%s2 + $0x28] sm:$0xff]
  %v234 = vld [vmem:[%s2 + $0x30] sm:$0xff]
  %v235 = vld [vmem:[%s2 + $0x38] sm:$0xff]
  %v236 = vld [vmem:[%s2 + $0x40] sm:$0xff]
  %v237 = vld [vmem:[%s2 + $0x48] sm:$0xff]
  %v238 = vld [vmem:[%s2 + $0x50] sm:$0xff]
  %v239 = vld [vmem:[%s2 + $0x58] sm:$0xff]
  %v240 = vld [vmem:[%s2 + $0x60] sm:$0xff]
  %v241 = vld [vmem:[%s2 + $0x68] sm:$0xff]
  %v242 = vld [vmem:[%s2 + $0x70] sm:$0xff]
  %v243 = vld [vmem:[%s2 + $0x78] sm:$0xff]
  %v244 = vld [vmem:[%s2 + $0x80] sm:$0xff]
  %v245 = vld [vmem:[%s2 + $0x88] sm:$0xff]
  %v246 = vld [vmem:[%s2 + $0x90] sm:$0xff]
  %v247 = vld [vmem:[%s2 + $0x98] sm:$0xff]
  %v248 = vld [vmem:[%s2 + $0xa0] sm:$0xff]
  %250 = vrot.lane.b32.xlu0 %v227, 112
  %v251 = vpop.permute.xlu0 %250
  %v252 = vsel %vm40, %v251, 0
  %254 = vmatpush.msra.mxu0 0.0
  %255 = vmatpush.msra.mxu0 0.0
  %256 = vmatpush.msra.mxu0 0.0
  %257 = vmatpush.msra.mxu0 0.0
  %258 = vmatpush.msra.mxu0 0.0
  %259 = vmatpush.msra.mxu0 0.0
  %260 = vmatpush.msra.mxu0 0.0
  %261 = vmatpush.msra.mxu0 0.0
  %262 = vmatpush.msra.mxu0 0.0
  %263 = vmatpush.msra.mxu0 0.0
  %264 = vmatpush.msra.mxu0 0.0
  %265 = vmatpush.msra.mxu0 0.0
  %266 = vmatpush.msra.mxu0 0.0
  %267 = vmatpush.msra.mxu0 0.0
  %268 = vmatpush.msra.mxu0 %v229
  %269 = vmatpush.msra.mxu0 %v228
  %270 = vmatmul.f32.gmra.mxu0 %v252
  %v271 = vpop.f32.mrf.mxu0
  %v272 = vadd.f32 %v230, %v271
  %273 = vdwg.mxu0
  %v274 = vmul.f32 %v272, 0.01
  %v275 = vmax.f32 %v272, %v274
  %v277 = vsel %vm65, %v275, 0
  %279 = vmatpush.msra.mxu0 0.0
  %280 = vmatpush.msra.mxu0 0.0
  %281 = vmatpush.msra.mxu0 0.0
  %282 = vmatpush.msra.mxu0 0.0
  %283 = vmatpush.msra.mxu0 0.0
  %284 = vmatpush.msra.mxu0 0.0
  %285 = vmatpush.msra.mxu0 0.0
  %286 = vmatpush.msra.mxu0 0.0
  %287 = vmatpush.msra.mxu0 %v238
  %288 = vmatpush.msra.mxu0 %v237
  %289 = vmatpush.msra.mxu0 %v236
  %290 = vmatpush.msra.mxu0 %v235
  %291 = vmatpush.msra.mxu0 %v234
  %292 = vmatpush.msra.mxu0 %v233
  %293 = vmatpush.msra.mxu0 %v232
  %294 = vmatpush.msra.mxu0 %v231
  %295 = vmatmul.f32.gmra.mxu0 %v277
  %v296 = vpop.f32.mrf.mxu0
  %v297 = vadd.f32 %v239, %v296
  %298 = vdwg.mxu0
  %v299 = vmul.f32 %v297, 0.01
  %v300 = vmax.f32 %v297, %v299
  %v302 = vsel %vm65, %v300, 0
  %304 = vmatpush.msra.mxu0 0.0
  %305 = vmatpush.msra.mxu0 0.0
  %306 = vmatpush.msra.mxu0 0.0
  %307 = vmatpush.msra.mxu0 0.0
  %308 = vmatpush.msra.mxu0 0.0
  %309 = vmatpush.msra.mxu0 0.0
  %310 = vmatpush.msra.mxu0 0.0
  %311 = vmatpush.msra.mxu0 0.0
  %312 = vmatpush.msra.mxu0 %v247
  %313 = vmatpush.msra.mxu0 %v246
  %314 = vmatpush.msra.mxu0 %v245
  %315 = vmatpush.msra.mxu0 %v244
  %316 = vmatpush.msra.mxu0 %v243
  %317 = vmatpush.msra.mxu0 %v242
  %318 = vmatpush.msra.mxu0 %v241
  %319 = vmatpush.msra.mxu0 %v240
  %320 = vmatmul.f32.gmra.mxu0 %v302
  %v321 = vpop.f32.mrf.mxu0
  %v322 = vadd.f32 %v248, %v321
  %323 = vdwg.mxu0
  %v324 = vtanh.pop %v322
  %326 = vrot.lane.b32.xlu0 %v322, 112
  %v327 = vpop.permute.xlu0 %326
  %v329 = vsub.f32 %v123, %v327
  %v330 = vsub.f32 0.0, %v324
  %v331 = vmul.f32 %v330, 1.442695
  %v332 = vpow.pop %v331
  %v333 = vmul.f32 %v329, %v332
  %v334 = vld [vmem:[%s2 + $0x1f8] sm:$0xff]
  %v335 = vld [vmem:[%s2 + $0x200] sm:$0xff]
  %v336 = vld [vmem:[%s2 + $0x208] sm:$0xff]
  %v337 = vld [vmem:[%s2 + $0x210] sm:$0xff]
  %v338 = vld [vmem:[%s2 + $0x218] sm:$0xff]
  %v339 = vld [vmem:[%s2 + $0x220] sm:$0xff]
  %v340 = vld [vmem:[%s2 + $0x228] sm:$0xff]
  %v341 = vld [vmem:[%s2 + $0x230] sm:$0xff]
  %v342 = vld [vmem:[%s2 + $0x238] sm:$0xff]
  %v343 = vld [vmem:[%s2 + $0x240] sm:$0xff]
  %v344 = vld [vmem:[%s2 + $0x248] sm:$0xff]
  %v345 = vld [vmem:[%s2 + $0x250] sm:$0xff]
  %v346 = vld [vmem:[%s2 + $0x258] sm:$0xff]
  %v347 = vld [vmem:[%s2 + $0x260] sm:$0xff]
  %v348 = vld [vmem:[%s2 + $0x268] sm:$0xff]
  %v349 = vld [vmem:[%s2 + $0x270] sm:$0xff]
  %v350 = vld [vmem:[%s2 + $0x278] sm:$0xff]
  %v351 = vld [vmem:[%s2 + $0x280] sm:$0xff]
  %v352 = vld [vmem:[%s2 + $0x288] sm:$0xff]
  %v353 = vld [vmem:[%s2 + $0x290] sm:$0xff]
  %v354 = vld [vmem:[%s2 + $0x298] sm:$0xff]
  %v356 = vsel %vm40, %v333, 0
  %358 = vmatpush.msra.mxu0 0.0
  %359 = vmatpush.msra.mxu0 0.0
  %360 = vmatpush.msra.mxu0 0.0
  %361 = vmatpush.msra.mxu0 0.0
  %362 = vmatpush.msra.mxu0 0.0
  %363 = vmatpush.msra.mxu0 0.0
  %364 = vmatpush.msra.mxu0 0.0
  %365 = vmatpush.msra.mxu0 0.0
  %366 = vmatpush.msra.mxu0 0.0
  %367 = vmatpush.msra.mxu0 0.0
  %368 = vmatpush.msra.mxu0 0.0
  %369 = vmatpush.msra.mxu0 0.0
  %370 = vmatpush.msra.mxu0 0.0
  %371 = vmatpush.msra.mxu0 0.0
  %372 = vmatpush.msra.mxu0 %v335
  %373 = vmatpush.msra.mxu0 %v334
  %374 = vmatmul.f32.gmra.mxu0 %v356
  %v375 = vpop.f32.mrf.mxu0
  %v376 = vadd.f32 %v336, %v375
  %377 = vdwg.mxu0
  %v378 = vmul.f32 %v376, 0.01
  %v379 = vmax.f32 %v376, %v378
  %v381 = vsel %vm65, %v379, 0
  %383 = vmatpush.msra.mxu0 0.0
  %384 = vmatpush.msra.mxu0 0.0
  %385 = vmatpush.msra.mxu0 0.0
  %386 = vmatpush.msra.mxu0 0.0
  %387 = vmatpush.msra.mxu0 0.0
  %388 = vmatpush.msra.mxu0 0.0
  %389 = vmatpush.msra.mxu0 0.0
  %390 = vmatpush.msra.mxu0 0.0
  %391 = vmatpush.msra.mxu0 %v344
  %392 = vmatpush.msra.mxu0 %v343
  %393 = vmatpush.msra.mxu0 %v342
  %394 = vmatpush.msra.mxu0 %v341
  %395 = vmatpush.msra.mxu0 %v340
  %396 = vmatpush.msra.mxu0 %v339
  %397 = vmatpush.msra.mxu0 %v338
  %398 = vmatpush.msra.mxu0 %v337
  %399 = vmatmul.f32.gmra.mxu0 %v381
  %v400 = vpop.f32.mrf.mxu0
  %v401 = vadd.f32 %v345, %v400
  %402 = vdwg.mxu0
  %v403 = vmul.f32 %v401, 0.01
  %v404 = vmax.f32 %v401, %v403
  %v406 = vsel %vm65, %v404, 0
  %408 = vmatpush.msra.mxu0 0.0
  %409 = vmatpush.msra.mxu0 0.0
  %410 = vmatpush.msra.mxu0 0.0
  %411 = vmatpush.msra.mxu0 0.0
  %412 = vmatpush.msra.mxu0 0.0
  %413 = vmatpush.msra.mxu0 0.0
  %414 = vmatpush.msra.mxu0 0.0
  %415 = vmatpush.msra.mxu0 0.0
  %416 = vmatpush.msra.mxu0 %v353
  %417 = vmatpush.msra.mxu0 %v352
  %418 = vmatpush.msra.mxu0 %v351
  %419 = vmatpush.msra.mxu0 %v350
  %420 = vmatpush.msra.mxu0 %v349
  %421 = vmatpush.msra.mxu0 %v348
  %422 = vmatpush.msra.mxu0 %v347
  %423 = vmatpush.msra.mxu0 %v346
  %424 = vmatmul.f32.gmra.mxu0 %v406
  %v425 = vpop.f32.mrf.mxu0
  %v426 = vadd.f32 %v354, %v425
  %427 = vdwg.mxu0
  %v428 = vadd.f32 %v426, %v333
  %v429 = vtanh.pop %v428
  %v431 = vsel %vm40, %v15, 0
  %433 = vmatpush.msra.mxu0 0.0
  %434 = vmatpush.msra.mxu0 0.0
  %435 = vmatpush.msra.mxu0 0.0
  %436 = vmatpush.msra.mxu0 0.0
  %437 = vmatpush.msra.mxu0 0.0
  %438 = vmatpush.msra.mxu0 0.0
  %439 = vmatpush.msra.mxu0 0.0
  %440 = vmatpush.msra.mxu0 0.0
  %441 = vmatpush.msra.mxu0 0.0
  %442 = vmatpush.msra.mxu0 0.0
  %443 = vmatpush.msra.mxu0 0.0
  %444 = vmatpush.msra.mxu0 0.0
  %445 = vmatpush.msra.mxu0 0.0
  %446 = vmatpush.msra.mxu0 0.0
  %447 = vmatpush.msra.mxu0 %v229
  %448 = vmatpush.msra.mxu0 %v228
  %449 = vmatmul.f32.gmra.mxu0 %v431
  %v450 = vpop.f32.mrf.mxu0
  %v451 = vadd.f32 %v230, %v450
  %452 = vdwg.mxu0
  %v453 = vmul.f32 %v451, 0.01
  %v454 = vmax.f32 %v451, %v453
  %v456 = vsel %vm65, %v454, 0
  %458 = vmatpush.msra.mxu0 0.0
  %459 = vmatpush.msra.mxu0 0.0
  %460 = vmatpush.msra.mxu0 0.0
  %461 = vmatpush.msra.mxu0 0.0
  %462 = vmatpush.msra.mxu0 0.0
  %463 = vmatpush.msra.mxu0 0.0
  %464 = vmatpush.msra.mxu0 0.0
  %465 = vmatpush.msra.mxu0 0.0
  %466 = vmatpush.msra.mxu0 %v238
  %467 = vmatpush.msra.mxu0 %v237
  %468 = vmatpush.msra.mxu0 %v236
  %469 = vmatpush.msra.mxu0 %v235
  %470 = vmatpush.msra.mxu0 %v234
  %471 = vmatpush.msra.mxu0 %v233
  %472 = vmatpush.msra.mxu0 %v232
  %473 = vmatpush.msra.mxu0 %v231
  %474 = vmatmul.f32.gmra.mxu0 %v456
  %v475 = vpop.f32.mrf.mxu0
  %v476 = vadd.f32 %v239, %v475
  %477 = vdwg.mxu0
  %v478 = vmul.f32 %v476, 0.01
  %v479 = vmax.f32 %v476, %v478
  %v481 = vsel %vm65, %v479, 0
  %483 = vmatpush.msra.mxu0 0.0
  %484 = vmatpush.msra.mxu0 0.0
  %485 = vmatpush.msra.mxu0 0.0
  %486 = vmatpush.msra.mxu0 0.0
  %487 = vmatpush.msra.mxu0 0.0
  %488 = vmatpush.msra.mxu0 0.0
  %489 = vmatpush.msra.mxu0 0.0
  %490 = vmatpush.msra.mxu0 0.0
  %491 = vmatpush.msra.mxu0 %v247
  %492 = vmatpush.msra.mxu0 %v246
  %493 = vmatpush.msra.mxu0 %v245
  %494 = vmatpush.msra.mxu0 %v244
  %495 = vmatpush.msra.mxu0 %v243
  %496 = vmatpush.msra.mxu0 %v242
  %497 = vmatpush.msra.mxu0 %v241
  %498 = vmatpush.msra.mxu0 %v240
  %499 = vmatmul.f32.gmra.mxu0 %v481
  %v500 = vpop.f32.mrf.mxu0
  %v501 = vadd.f32 %v248, %v500
  %502 = vdwg.mxu0
  %v503 = vtanh.pop %v501
  %v504 = vmul.f32 %v503, 1.442695
  %v505 = vpow.pop %v504
  %v506 = vmul.f32 %v429, %v505
  %508 = vrot.lane.b32.xlu0 %v501, 112
  %v509 = vpop.permute.xlu0 %508
  %v511 = vadd.f32 %v506, %v509
  %v513 = vsel %vm40, %v511, 0
  %515 = vmatpush.msra.mxu0 0.0
  %516 = vmatpush.msra.mxu0 0.0
  %517 = vmatpush.msra.mxu0 0.0
  %518 = vmatpush.msra.mxu0 0.0
  %519 = vmatpush.msra.mxu0 0.0
  %520 = vmatpush.msra.mxu0 0.0
  %521 = vmatpush.msra.mxu0 0.0
  %522 = vmatpush.msra.mxu0 0.0
  %523 = vmatpush.msra.mxu0 0.0
  %524 = vmatpush.msra.mxu0 0.0
  %525 = vmatpush.msra.mxu0 0.0
  %526 = vmatpush.msra.mxu0 0.0
  %527 = vmatpush.msra.mxu0 0.0
  %528 = vmatpush.msra.mxu0 0.0
  %529 = vmatpush.msra.mxu0 %v125
  %530 = vmatpush.msra.mxu0 %v124
  %531 = vmatmul.f32.gmra.mxu0 %v513
  %v532 = vpop.f32.mrf.mxu0
  %v533 = vadd.f32 %v126, %v532
  %534 = vdwg.mxu0
  %v535 = vmul.f32 %v533, 0.01
  %v536 = vmax.f32 %v533, %v535
  %v538 = vsel %vm65, %v536, 0
  %540 = vmatpush.msra.mxu0 0.0
  %541 = vmatpush.msra.mxu0 0.0
  %542 = vmatpush.msra.mxu0 0.0
  %543 = vmatpush.msra.mxu0 0.0
  %544 = vmatpush.msra.mxu0 0.0
  %545 = vmatpush.msra.mxu0 0.0
  %546 = vmatpush.msra.mxu0 0.0
  %547 = vmatpush.msra.mxu0 0.0
  %548 = vmatpush.msra.mxu0 %v134
  %549 = vmatpush.msra.mxu0 %v133
  %550 = vmatpush.msra.mxu0 %v132
  %551 = vmatpush.msra.mxu0 %v131
  %552 = vmatpush.msra.mxu0 %v130
  %553 = vmatpush.msra.mxu0 %v129
  %554 = vmatpush.msra.mxu0 %v128
  %555 = vmatpush.msra.mxu0 %v127
  %556 = vmatmul.f32.gmra.mxu0 %v538
  %v557 = vpop.f32.mrf.mxu0
  %v558 = vadd.f32 %v135, %v557
  %559 = vdwg.mxu0
  %v560 = vmul.f32 %v558, 0.01
  %v561 = vmax.f32 %v558, %v560
  %v563 = vsel %vm65, %v561, 0
  %565 = vmatpush.msra.mxu0 0.0
  %566 = vmatpush.msra.mxu0 0.0
  %567 = vmatpush.msra.mxu0 0.0
  %568 = vmatpush.msra.mxu0 0.0
  %569 = vmatpush.msra.mxu0 0.0
  %570 = vmatpush.msra.mxu0 0.0
  %571 = vmatpush.msra.mxu0 0.0
  %572 = vmatpush.msra.mxu0 0.0
  %573 = vmatpush.msra.mxu0 %v143
  %574 = vmatpush.msra.mxu0 %v142
  %575 = vmatpush.msra.mxu0 %v141
  %576 = vmatpush.msra.mxu0 %v140
  %577 = vmatpush.msra.mxu0 %v139
  %578 = vmatpush.msra.mxu0 %v138
  %579 = vmatpush.msra.mxu0 %v137
  %580 = vmatpush.msra.mxu0 %v136
  %581 = vmatmul.f32.gmra.mxu0 %v563
  %v582 = vpop.f32.mrf.mxu0
  %v583 = vadd.f32 %v144, %v582
  %584 = vdwg.mxu0
  %v585 = vtanh.pop %v583
  %v586 = vmul.f32 %v585, 1.442695
  %v587 = vpow.pop %v586
  %v588 = vmul.f32 %v15, %v587
  %590 = vrot.lane.b32.xlu0 %v583, 112
  %v591 = vpop.permute.xlu0 %590
  %v593 = vadd.f32 %v588, %v591
  %v595 = vsel %vm40, %v593, 0
  %597 = vmatpush.msra.mxu0 0.0
  %598 = vmatpush.msra.mxu0 0.0
  %599 = vmatpush.msra.mxu0 0.0
  %600 = vmatpush.msra.mxu0 0.0
  %601 = vmatpush.msra.mxu0 0.0
  %602 = vmatpush.msra.mxu0 0.0
  %603 = vmatpush.msra.mxu0 0.0
  %604 = vmatpush.msra.mxu0 0.0
  %605 = vmatpush.msra.mxu0 0.0
  %606 = vmatpush.msra.mxu0 0.0
  %607 = vmatpush.msra.mxu0 0.0
  %608 = vmatpush.msra.mxu0 0.0
  %609 = vmatpush.msra.mxu0 0.0
  %610 = vmatpush.msra.mxu0 0.0
  %611 = vmatpush.msra.mxu0 %v17
  %612 = vmatpush.msra.mxu0 %v16
  %613 = vmatmul.f32.gmra.mxu0 %v595
  %v614 = vpop.f32.mrf.mxu0
  %v615 = vadd.f32 %v18, %v614
  %616 = vdwg.mxu0
  %v617 = vmul.f32 %v615, 0.01
  %v618 = vmax.f32 %v615, %v617
  %v620 = vsel %vm65, %v618, 0
  %622 = vmatpush.msra.mxu0 0.0
  %623 = vmatpush.msra.mxu0 0.0
  %624 = vmatpush.msra.mxu0 0.0
  %625 = vmatpush.msra.mxu0 0.0
  %626 = vmatpush.msra.mxu0 0.0
  %627 = vmatpush.msra.mxu0 0.0
  %628 = vmatpush.msra.mxu0 0.0
  %629 = vmatpush.msra.mxu0 0.0
  %630 = vmatpush.msra.mxu0 %v26
  %631 = vmatpush.msra.mxu0 %v25
  %632 = vmatpush.msra.mxu0 %v24
  %633 = vmatpush.msra.mxu0 %v23
  %634 = vmatpush.msra.mxu0 %v22
  %635 = vmatpush.msra.mxu0 %v21
  %636 = vmatpush.msra.mxu0 %v20
  %637 = vmatpush.msra.mxu0 %v19
  %638 = vmatmul.f32.gmra.mxu0 %v620
  %v639 = vpop.f32.mrf.mxu0
  %v640 = vadd.f32 %v27, %v639
  %641 = vdwg.mxu0
  %v642 = vmul.f32 %v640, 0.01
  %v643 = vmax.f32 %v640, %v642
  %v645 = vsel %vm65, %v643, 0
  %647 = vmatpush.msra.mxu0 0.0
  %648 = vmatpush.msra.mxu0 0.0
  %649 = vmatpush.msra.mxu0 0.0
  %650 = vmatpush.msra.mxu0 0.0
  %651 = vmatpush.msra.mxu0 0.0
  %652 = vmatpush.msra.mxu0 0.0
  %653 = vmatpush.msra.mxu0 0.0
  %654 = vmatpush.msra.mxu0 0.0
  %655 = vmatpush.msra.mxu0 %v35
  %656 = vmatpush.msra.mxu0 %v34
  %657 = vmatpush.msra.mxu0 %v33
  %658 = vmatpush.msra.mxu0 %v32
  %659 = vmatpush.msra.mxu0 %v31
  %660 = vmatpush.msra.mxu0 %v30
  %661 = vmatpush.msra.mxu0 %v29
  %662 = vmatpush.msra.mxu0 %v28
  %663 = vmatmul.f32.gmra.mxu0 %v645
  %v664 = vpop.f32.mrf.mxu0
  %v665 = vadd.f32 %v36, %v664
  %666 = vdwg.mxu0
  %v667 = vtanh.pop %v665
  %v668 = vmul.f32 %v667, 1.442695
  %v669 = vpow.pop %v668
  %v670 = vmul.f32 %v511, %v669
  %672 = vrot.lane.b32.xlu0 %v665, 112
  %v673 = vpop.permute.xlu0 %672
  %v675 = vadd.f32 %v670, %v673
  %676 = vrot.lane.b32.xlu0 %v593, 16
  %v677 = vpop.permute.xlu0 %676
  %v679 = vsel %vm40, %v675, %v677
  %vm680 = vcmask 261120
  %681 = vst.msk [vmem:[%s3] sm:$0xff] %vm680, %v679
  // Predicated region
  $region14: #{nis_forward.1} parent=0 // pred_check
    _
  $region15: #{nis_forward.1} parent=0 // pred_check_branch
    %683 = sbr.rel (0) target = $region17
  $region16: #{nis_forward.1} parent=0 // pred_region
    _
  $region17: #{nis_forward.1} parent=0 // pred_fallthru
    _
  // Predicated region
  $region18: #{nis_forward.1} parent=0 // pred_check
    _
  $region19: #{nis_forward.1} parent=0 // pred_check_branch
    %685 = sbr.rel (0) target = $region21
  $region20: #{nis_forward.1} parent=0 // pred_region
    _
  $region21: #{nis_forward.1} parent=0 // pred_fallthru
    _

</llo_original>
